<compile_context>
chip_gen: v6e
topology: v6e:2x2x1
jax: 0.10.0
libtpu: 0.0.40
codegen_flags: <defaults>
</compile_context>

<pallas_src>
import functools

import jax
import jax.numpy as jnp
from jax.experimental import pallas as pl
from jax.experimental.pallas import tpu as pltpu


def _round_up(x, m):
    return ((x + m - 1) // m) * m


# --------------------------------------------------------------------------
# Dense path: adj = sigmoid(z @ z.T), tiled over a 2-D output grid.
# --------------------------------------------------------------------------
def _dense_kernel(zr_ref, zc_ref, out_ref):
    # zr_ref: (tm, D) row tile of z; zc_ref: (tn, D) "column" tile of z.
    # Contract over the shared last dim (trans-B matmul) -> no transpose
    # materialized inside the hot loop.
    logits = jax.lax.dot_general(
        zr_ref[...],
        zc_ref[...],
        dimension_numbers=(((1,), (1,)), ((), ())),
        preferred_element_type=jnp.float32,
    )
    out_ref[...] = jax.nn.sigmoid(logits).astype(out_ref.dtype)


@functools.partial(jax.jit, static_argnames=("tm", "tn", "out_dtype"))
def inner_product_decoder_dense(z, *, tm=256, tn=512, out_dtype=None):
    """sigmoid(z @ z.T) via Pallas with a 2-D (rows x cols) output grid.

    out_dtype defaults to z.dtype to preserve module semantics; pass
    jnp.bfloat16 to halve the N^2 HBM writeback on bandwidth-bound shapes.
    """
    n, d = z.shape
    out_dtype = out_dtype if out_dtype is not None else z.dtype

    # Row tile: multiple of 8 (sublanes); column tile: multiple of 128 (lanes).
    tm = min(tm, _round_up(n, 8))
    tn = min(tn, _round_up(n, 128))
    n_rows = _round_up(n, tm)
    n_cols = _round_up(n, tn)
    z_rows = jnp.pad(z, ((0, n_rows - n), (0, 0))) if n_rows != n else z
    z_cols = jnp.pad(z, ((0, n_cols - n), (0, 0))) if n_cols != n else z

    adj = pl.pallas_call(
        _dense_kernel,
        out_shape=jax.ShapeDtypeStruct((n_rows, n_cols), out_dtype),
        grid_spec=pltpu.PrefetchScalarGridSpec(
            num_scalar_prefetch=0,
            grid=(n_rows // tm, n_cols // tn),
            in_specs=[
                pl.BlockSpec((tm, d), lambda i, j: (i, 0)),  # row tile of z
                pl.BlockSpec((tn, d), lambda i, j: (j, 0)),  # col tile of z
            ],
            out_specs=pl.BlockSpec((tm, tn), lambda i, j: (i, j)),
        ),
        compiler_params=pltpu.CompilerParams(
            dimension_semantics=("parallel", "parallel"),
            vmem_limit_bytes=32 * 1024 * 1024,
        ),
    )(z_rows, z_cols)
    return adj[:n, :n]


# --------------------------------------------------------------------------
# Edge path: sigmoid(sum(z[row] * z[col], dim=1)), lane-dense over edges.
# --------------------------------------------------------------------------
def _edge_kernel(zr_ref, zc_ref, out_ref):
    # zr_ref, zc_ref: (D, te) lane-major edge-feature tiles; out_ref: (1, te).
    s = jnp.sum(zr_ref[...] * zc_ref[...], axis=0, keepdims=True)
    out_ref[...] = jax.nn.sigmoid(s).astype(out_ref.dtype)


@functools.partial(jax.jit, static_argnames=("te",))
def inner_product_decoder_edges(z, edge_index, *, te=512):
    """sigmoid(sum(z[row] * z[col], -1)), tiled over edges with lane-dense IO."""
    row, col = edge_index[0], edge_index[1]
    # Gather + transpose are XLA glue fused under this jit; the kernel sees
    # lane-dense (D, E) operands and writes a lane-dense (1, E) output.
    zr_t = jnp.take(z, row, axis=0).T  # (D, E)
    zc_t = jnp.take(z, col, axis=0).T  # (D, E)
    d, e = zr_t.shape

    te = min(te, _round_up(e, 128))
    e_pad = _round_up(e, te)
    if e_pad != e:
        zr_t = jnp.pad(zr_t, ((0, 0), (0, e_pad - e)))
        zc_t = jnp.pad(zc_t, ((0, 0), (0, e_pad - e)))

    out = pl.pallas_call(
        _edge_kernel,
        out_shape=jax.ShapeDtypeStruct((1, e_pad), jnp.float32),
        grid_spec=pltpu.PrefetchScalarGridSpec(
            num_scalar_prefetch=0,
            grid=(e_pad // te,),
            in_specs=[
                pl.BlockSpec((d, te), lambda i: (0, i)),
                pl.BlockSpec((d, te), lambda i: (0, i)),
            ],
            out_specs=pl.BlockSpec((1, te), lambda i: (0, i)),
        ),
        compiler_params=pltpu.CompilerParams(
            dimension_semantics=("parallel",),
            vmem_limit_bytes=32 * 1024 * 1024,
        ),
    )(zr_t, zc_t)
    return out[0, :e]


# --------------------------------------------------------------------------
# Module-like wrapper
# --------------------------------------------------------------------------
def inner_product_decoder(z, edge_index=None, dropout=0.0):
    # dropout is identity in eval mode / p == 0.0.
    # TODO(synk): training-mode dropout (p > 0) not implemented.
    del dropout
    if edge_index is None:
        return inner_product_decoder_dense(z)
    return inner_product_decoder_edges(z, edge_index)


if __name__ == "__main__":
    key = jax.random.PRNGKey(0)
    num_nodes, latent_dim = 16, 32
    z = jax.random.normal(key, (num_nodes, latent_dim), dtype=jnp.float32)

    # Dense adjacency reconstruction
    adj = inner_product_decoder(z)
    adj = jax.block_until_ready(adj)

    # Edge-wise probabilities
    edge_index = jnp.array(
        [[0, 1, 2, 3, 4, 5, 6, 7],
         [8, 9, 10, 11, 12, 13, 14, 15]], dtype=jnp.int32
    )
    p = inner_product_decoder(z, edge_index)
    p = jax.block_until_ready(p)

    # Reference checks (plain JAX)
    adj_ref = jax.nn.sigmoid(z @ z.T)
    p_ref = jax.nn.sigmoid(jnp.sum(z[edge_index[0]] * z[edge_index[1]], axis=1))
    assert adj.shape == (num_nodes, num_nodes)
    assert p.shape == (edge_index.shape[1],)
    assert jnp.allclose(adj, adj_ref, atol=1e-5)
    assert jnp.allclose(p, p_ref, atol=1e-5)

    print("KERNEL_OK")
</pallas_src>

<mosaic_0001>
module attributes {stable_mosaic.version = 11 : i64} {
  func.func @_dense_kernel(%arg0: i32, %arg1: i32, %arg2: memref<16x32xf32, #tpu.memory_space<vmem>>, %arg3: memref<128x32xf32, #tpu.memory_space<vmem>>, %arg4: memref<16x128xf32, #tpu.memory_space<vmem>>) attributes {dimension_semantics = [#tpu.dimension_semantics<parallel>, #tpu.dimension_semantics<parallel>], iteration_bounds = array<i64: 1, 1>, scalar_prefetch = 0 : i64, scratch_operands = 0 : i64, tpu.core_type = #tpu.core_type<tc>, window_params = [{transform_indices = @transform_0, window_bounds = array<i64: 16, 32>}, {transform_indices = @transform_1, window_bounds = array<i64: 128, 32>}, {transform_indices = @transform_2, window_bounds = array<i64: 16, 128>}]} {
    %c0 = arith.constant 0 : index
    %c0_0 = arith.constant 0 : index
    %0 = vector.load %arg2[%c0, %c0_0] : memref<16x32xf32, #tpu.memory_space<vmem>>, vector<16x32xf32>
    %c0_1 = arith.constant 0 : index
    %c0_2 = arith.constant 0 : index
    %1 = vector.load %arg3[%c0_1, %c0_2] : memref<128x32xf32, #tpu.memory_space<vmem>>, vector<128x32xf32>
    %cst = arith.constant dense<0.000000e+00> : vector<16x128xf32>
    %2 = tpu.matmul %0, %1, %cst {dimension_numbers = #tpu.dot_dimension_numbers<[1], [1], [0], [0], [0, 0, 1, 0], [], []>} : vector<16x32xf32>, vector<128x32xf32>, vector<16x128xf32> -> vector<16x128xf32>
    %3 = arith.negf %2 : vector<16x128xf32>
    %4 = math.exp %3 : vector<16x128xf32>
    %cst_3 = arith.constant 1.000000e+00 : f32
    %5 = vector.broadcast %cst_3 : f32 to vector<16x128xf32>
    %6 = arith.addf %5, %4 : vector<16x128xf32>
    %7 = arith.divf %5, %6 : vector<16x128xf32>
    %c0_4 = arith.constant 0 : index
    %c0_5 = arith.constant 0 : index
    %8 = vector.load %arg4[%c0_4, %c0_5] : memref<16x128xf32, #tpu.memory_space<vmem>>, vector<16x128xf32>
    tpu.vector_store %arg4[%c0_4, %c0_5], %7 {strides = array<i32>} : memref<16x128xf32, #tpu.memory_space<vmem>>, vector<16x128xf32>,
    return
  }
  func.func @transform_0(%arg0: i32, %arg1: i32) -> (i32, i32) {
    %c0_i32 = arith.constant 0 : i32
    %c0_i32_0 = arith.constant 0 : i32
    return %arg0, %c0_i32 : i32, i32
  }
  func.func @transform_1(%arg0: i32, %arg1: i32) -> (i32, i32) {
    %c0_i32 = arith.constant 0 : i32
    %c0_i32_0 = arith.constant 0 : i32
    return %arg1, %c0_i32 : i32, i32
  }
  func.func @transform_2(%arg0: i32, %arg1: i32) -> (i32, i32) {
    %c0_i32 = arith.constant 0 : i32
    return %arg0, %arg1 : i32, i32
  }
}

</mosaic_0001>

<llo_original>
// kernel: inner_product_decoder_dense.1
$region0: #{inner_product_decoder_dense.1}
  #allocation0 [shape = 'u32[]', space=smem, size = 0x4, offset = 0x4, fixed_abs, tag = 'smem constant byte address 0x4 - core index']
  #allocation1 [shape = 'u32[144,128]{1,0:T(1,128)}', space=vmem, size = 0x12000, scoped, tag = 'internal scratch']
  %s0 = inlined_call_operand.vmem [shape: f32[16,32], index: 0, kind: input, shape index: {}]
  %s1 = inlined_call_operand.vmem [shape: f32[128,32], index: 1, kind: input, shape index: {}]
  %s2 = inlined_call_operand.hbm [shape: f32[16,128], index: 2, kind: output, shape index: {}]
  %s3 = sld [smem:[#allocation0]]
  $region18: #{inner_product_decoder_dense.1} parent=0
    _
  %s5 = ssub.s32 1, %s3
  %s6 = scalar_select 0, %s5, %s3
  $region1: #{inner_product_decoder_dense.1} parent=0
    #allocation2 [shape = 'u8[8192]{0}', space=vmem, size = 0x2000, scoped, tag = 'output window, operand 0, single buffered']
    #allocation3 [shape = 's32[1]{0}', space=sflag, size = 0x4, scoped, tag = 'scoped memory for inner_product_decoder_dense.1']
    %7 = vsyncpa [#allocation3], 0
    // Predicated region
    $region2: #{inner_product_decoder_dense.1} parent=1 // pred_check
      _
    $region3: #{inner_product_decoder_dense.1} parent=1 // pred_check_branch
      %9 = sbr.rel (0) target = $region5
    $region4: #{inner_product_decoder_dense.1} parent=1 // pred_region
      _
    $region5: #{inner_product_decoder_dense.1} parent=1 // pred_fallthru
      _
    // Predicated region
    $region6: #{inner_product_decoder_dense.1} parent=1 // pred_check
      _
    $region7: #{inner_product_decoder_dense.1} parent=1 // pred_check_branch
      %11 = sbr.rel (0) target = $region9
    $region8: #{inner_product_decoder_dense.1} parent=1 // pred_region
      _
    $region9: #{inner_product_decoder_dense.1} parent=1 // pred_fallthru
      _
    %v12 = vld [vmem:[%s0] sm:$0xff]
    %v13 = vld [vmem:[%s0 + $0x8] sm:$0xff]
    %v14 = vld [vmem:[%s1] sm:$0xff]
    %v15 = vld [vmem:[%s1 + $0x8] sm:$0xff]
    %v16 = vld [vmem:[%s1 + $0x10] sm:$0xff]
    %v17 = vld [vmem:[%s1 + $0x18] sm:$0xff]
    %v18 = vld [vmem:[%s1 + $0x20] sm:$0xff]
    %v19 = vld [vmem:[%s1 + $0x28] sm:$0xff]
    %v20 = vld [vmem:[%s1 + $0x30] sm:$0xff]
    %v21 = vld [vmem:[%s1 + $0x38] sm:$0xff]
    %v22 = vld [vmem:[%s1 + $0x40] sm:$0xff]
    %v23 = vld [vmem:[%s1 + $0x48] sm:$0xff]
    %v24 = vld [vmem:[%s1 + $0x50] sm:$0xff]
    %v25 = vld [vmem:[%s1 + $0x58] sm:$0xff]
    %v26 = vld [vmem:[%s1 + $0x60] sm:$0xff]
    %v27 = vld [vmem:[%s1 + $0x68] sm:$0xff]
    %v28 = vld [vmem:[%s1 + $0x70] sm:$0xff]
    %v29 = vld [vmem:[%s1 + $0x78] sm:$0xff]
    %vm30 = vcmask 261120
    %v32 = vsel %vm30, %v12, 0
    %v35 = vsel %vm30, %v13, 0
    %v38 = vsel %vm30, %v14, 0
    %v41 = vsel %vm30, %v15, 0
    %v44 = vsel %vm30, %v16, 0
    %v47 = vsel %vm30, %v17, 0
    %v50 = vsel %vm30, %v18, 0
    %v53 = vsel %vm30, %v19, 0
    %v56 = vsel %vm30, %v20, 0
    %v59 = vsel %vm30, %v21, 0
    %v62 = vsel %vm30, %v22, 0
    %v65 = vsel %vm30, %v23, 0
    %v68 = vsel %vm30, %v24, 0
    %v71 = vsel %vm30, %v25, 0
    %v74 = vsel %vm30, %v26, 0
    %v77 = vsel %vm30, %v27, 0
    %v80 = vsel %vm30, %v28, 0
    %v83 = vsel %vm30, %v29, 0
    %85 = vmatprep.subr.mxu0 0.0
    %86 = vmatpush1.xpose.msra.mxu0 %v83
    %87 = vmatprep.subr.mxu0 0.0
    %88 = vmatpush1.xpose.msra.mxu0 %v80
    %89 = vmatprep.subr.mxu0 0.0
    %90 = vmatpush1.xpose.msra.mxu0 %v77
    %91 = vmatprep.subr.mxu0 0.0
    %92 = vmatpush1.xpose.msra.mxu0 %v74
    %93 = vmatprep.subr.mxu0 0.0
    %94 = vmatpush1.xpose.msra.mxu0 %v71
    %95 = vmatprep.subr.mxu0 0.0
    %96 = vmatpush1.xpose.msra.mxu0 %v68
    %97 = vmatprep.subr.mxu0 0.0
    %98 = vmatpush1.xpose.msra.mxu0 %v65
    %99 = vmatprep.subr.mxu0 0.0
    %100 = vmatpush1.xpose.msra.mxu0 %v62
    %101 = vmatprep.subr.mxu0 0.0
    %102 = vmatpush1.xpose.msra.mxu0 %v59
    %103 = vmatprep.subr.mxu0 0.0
    %104 = vmatpush1.xpose.msra.mxu0 %v56
    %105 = vmatprep.subr.mxu0 0.0
    %106 = vmatpush1.xpose.msra.mxu0 %v53
    %107 = vmatprep.subr.mxu0 0.0
    %108 = vmatpush1.xpose.msra.mxu0 %v50
    %109 = vmatprep.subr.mxu0 0.0
    %110 = vmatpush1.xpose.msra.mxu0 %v47
    %111 = vmatprep.subr.mxu0 0.0
    %112 = vmatpush1.xpose.msra.mxu0 %v44
    %113 = vmatprep.subr.mxu0 0.0
    %114 = vmatpush1.xpose.msra.mxu0 %v41
    %115 = vmatprep.subr.mxu0 0.0
    %116 = vmatpush1.xpose.msra.mxu0 %v38
    %117 = vmatprep.subr.mxu0 0.0
    %118 = vmatpush2.xpose.msra.mxu0 0.0
    %119 = vmatprep.subr.mxu0 0.0
    %120 = vmatpush2.xpose.msra.mxu0 0.0
    %121 = vmatprep.subr.mxu0 0.0
    %122 = vmatpush2.xpose.msra.mxu0 0.0
    %123 = vmatprep.subr.mxu0 0.0
    %124 = vmatpush2.xpose.msra.mxu0 0.0
    %125 = vmatprep.subr.mxu0 0.0
    %126 = vmatpush2.xpose.msra.mxu0 0.0
    %127 = vmatprep.subr.mxu0 0.0
    %128 = vmatpush2.xpose.msra.mxu0 0.0
    %129 = vmatprep.subr.mxu0 0.0
    %130 = vmatpush2.xpose.msra.mxu0 0.0
    %131 = vmatprep.subr.mxu0 0.0
    %132 = vmatpush2.xpose.msra.mxu0 0.0
    %133 = vmatprep.subr.mxu0 0.0
    %134 = vmatpush2.xpose.msra.mxu0 0.0
    %135 = vmatprep.subr.mxu0 0.0
    %136 = vmatpush2.xpose.msra.mxu0 0.0
    %137 = vmatprep.subr.mxu0 0.0
    %138 = vmatpush2.xpose.msra.mxu0 0.0
    %139 = vmatprep.subr.mxu0 0.0
    %140 = vmatpush2.xpose.msra.mxu0 0.0
    %141 = vmatprep.subr.mxu0 0.0
    %142 = vmatpush2.xpose.msra.mxu0 0.0
    %143 = vmatprep.subr.mxu0 0.0
    %144 = vmatpush2.xpose.msra.mxu0 0.0
    %145 = vmatprep.subr.mxu0 0.0
    %146 = vmatpush2.xpose.msra.mxu0 0.0
    %147 = vmatprep.subr.mxu0 0.0
    %148 = vmatpush2.xpose.msra.mxu0 0.0
    %149 = vmatprep.mubr.f32.mxu0 0.0
    %150 = vmatmul.mubr.f32.gmra.mxu0 %v32
    %v151 = vpop.f32.mrf.mxu0
    %v152 = vadd.f32 0.0, %v151
    %v153 = vpop.f32.mrf.mxu0
    %154 = vmatprep.mubr.f32.mxu0 0.0
    %155 = vmatmul.mubr.f32.gmra.mxu0 %v35
    %v156 = vpop.f32.mrf.mxu0
    %v157 = vadd.f32 0.0, %v156
    %v158 = vpop.f32.mrf.mxu0
    %159 = vdwg.mxu0
    %v160 = vxor.u32 %v152, 2147483648
    %v161 = vxor.u32 %v157, 2147483648
    %v162 = vmul.f32 %v160, 1.442695
    %v163 = vpow.pop %v162
    %v164 = vmul.f32 %v161, 1.442695
    %v165 = vpow.pop %v164
    %v166 = vadd.f32 %v163, 1.0
    %v167 = vadd.f32 %v165, 1.0
    %v168 = vrcp.pop %v166
    %v169 = vmul.f32 1.0, %v168
    %v170 = vrcp.pop %v167
    %v171 = vmul.f32 1.0, %v170
    %172 = vst [vmem:[#allocation2] sm:$0xff] %v169
    %173 = vst [vmem:[#allocation2 + $0x8] sm:$0xff] %v171
    // Predicated region
    $region10: #{inner_product_decoder_dense.1} parent=1 // pred_check
      _
    $region11: #{inner_product_decoder_dense.1} parent=1 // pred_check_branch
      %175 = sbr.rel (0) target = $region13
    $region12: #{inner_product_decoder_dense.1} parent=1 // pred_region
      %s177 = ssub.s32 256, 256
      %178 = vsyncadd [#allocation3], %s177
      %s179 = sshll.u32 [#allocation2], 4
      %s180 = int_to_ptr.vmem [resolvable:$true] %s179
      %185 = dma.vmem_to_hbm [thread:$0]  %s180, 256, %s2, [#allocation3], 128, 128, 8
    $region13: #{inner_product_decoder_dense.1} parent=1 // pred_fallthru
      _
    // Predicated region
    $region14: #{inner_product_decoder_dense.1} parent=1 // pred_check
      _
    $region15: #{inner_product_decoder_dense.1} parent=1 // pred_check_branch
      %187 = sbr.rel (0) target = $region17
    $region16: #{inner_product_decoder_dense.1} parent=1 // pred_region
      %188 = dma.done [#allocation3], 256
    $region17: #{inner_product_decoder_dense.1} parent=1 // pred_fallthru
      _
    %189 = vsyncpa [#allocation3], 1

</llo_original>
